<compile_context>
chip_gen: v7x
topology: tpu7x:2x2x1
jax: 0.10.0
libtpu: 0.0.40
codegen_flags: <defaults>
</compile_context>

<pallas_src>
import functools

import jax
import jax.numpy as jnp
from jax.experimental import pallas as pl
from jax.experimental.pallas import tpu as pltpu


def _round_down(x, m):
    return (x // m) * m


def _mean_pool_kernel(h_ref, m_ref, o_ref, msum_ref, *, seq_len, block_s):
    # h_ref:    (TB, TS, TH)  hidden-state tile, original dtype (f32 / bf16)
    # m_ref:    (TB, TS)      attention-mask tile, original (integer/float) dtype
    # o_ref:    (TB, TH)      f32 output block, resident across the S grid axis
    # msum_ref: (TB, 1)       f32 scratch: running sum of the mask
    s = pl.program_id(2)

    @pl.when(s == 0)
    def _init():
        o_ref[...] = jnp.zeros_like(o_ref)
        msum_ref[...] = jnp.zeros_like(msum_ref)

    h = h_ref[...]                                  # keep input dtype
    m = m_ref[...].astype(jnp.float32)              # (TB, TS)

    if seq_len % block_s != 0:
        # Last S block is partial: out-of-bounds data is unspecified, so mask
        # both the weights and the hidden values (select, not multiply -> no
        # NaN*0 poisoning of the accumulator).
        col = jax.lax.broadcasted_iota(jnp.int32, m.shape, 1)
        valid = (s * block_s + col) < seq_len       # (TB, TS) bool
        m = jnp.where(valid, m, 0.0)
        weighted = jnp.where(valid[:, :, None],
                             h * m[:, :, None].astype(h.dtype),
                             0.0)
    else:
        weighted = h * m[:, :, None].astype(h.dtype)

    # Accumulate in f32 without materializing a full-width f32 copy of the tile.
    o_ref[...] += jnp.sum(weighted, axis=1, dtype=jnp.float32)
    msum_ref[...] += jnp.sum(m, axis=1, keepdims=True, dtype=jnp.float32)

    @pl.when(s == pl.num_programs(2) - 1)
    def _finalize():
        o_ref[...] *= 1.0 / jnp.maximum(msum_ref[...], 1e-9)


def mean_pooling(last_hidden_state, attention_mask, *, block_b=8, block_s=None,
                 vmem_limit_bytes=None):
    """Pallas mean pooling.

    Args:
      last_hidden_state: (B, S, H) float array (f32 or bf16).
      attention_mask:    (B, S) array (int / bool / float).
    Returns:
      (B, H) float32 mean-pooled embeddings.
    """
    B, S, H = last_hidden_state.shape
    assert attention_mask.shape == (B, S), "attention_mask must be (B, S)"
    itemsize = jnp.dtype(last_hidden_state.dtype).itemsize

    m = attention_mask
    if m.dtype == jnp.bool_:
        m = m.astype(jnp.int32)                     # tiny (B, S) cast only

    # ---- VMEM budget / limit (per generation) ------------------------------
    if vmem_limit_bytes is None:
        try:
            vmem_cap = int(pltpu.get_tpu_info().vmem_capacity_bytes)
        except Exception:
            vmem_cap = 64 * 1024 * 1024             # conservative (v7x-sized)
        vmem_limit_bytes = min(3 * vmem_cap // 4, 100 * 1024 * 1024)
    vmem_limit_bytes = int(vmem_limit_bytes)
    # Per pipelined hidden-state buffer (double-buffered by BlockSpec).
    budget = min(vmem_limit_bytes // 4, 16 * 1024 * 1024)

    try:
        kind = jax.devices()[0].device_kind.lower()
    except Exception:
        kind = ""
    two_tc = ("v7" in kind) or ("tpu7" in kind) or ("7x" in kind)

    # ---- tiling -------------------------------------------------------------
    TB = B if B <= block_b else block_b             # sublane-dense, divides by 8 or ==B
    b_blocks = pl.cdiv(B, TB)

    ts_min = S if S <= 128 else 128                 # minimum lane-aligned S tile

    if TB * ts_min * H * itemsize > budget:
        # Very wide hidden dim: tile H (multiple of 128) to keep depth-2
        # pipelining alive instead of blowing past the VMEM limit.
        th = budget // max(TB * ts_min * itemsize, 1)
        TH = min(H, max(128, _round_down(th, 128)))
    else:
        TH = H
        if two_tc and b_blocks == 1 and H >= 256 and H % 256 == 0:
            TH = H // 2                             # feed both v7x TensorCores
    h_blocks = pl.cdiv(H, TH)

    if block_s is not None:
        TS = min(int(block_s), S)
        if TS < S:
            TS = max(128, _round_down(TS, 128))     # mask lane dim must be 128-aligned
            if TS >= S:
                TS = S
    else:
        cap_s = budget // max(TB * TH * itemsize, 1)
        if cap_s >= S or S <= 128:
            TS = S
        else:
            TS = max(128, _round_down(cap_s, 128))
    s_blocks = pl.cdiv(S, TS)

    grid = (b_blocks, h_blocks, s_blocks)
    kernel = functools.partial(_mean_pool_kernel, seq_len=S, block_s=TS)

    out = pl.pallas_call(
        kernel,
        out_shape=jax.ShapeDtypeStruct((B, H), jnp.float32),
        grid_spec=pltpu.PrefetchScalarGridSpec(
            num_scalar_prefetch=0,
            grid=grid,
            in_specs=[
                pl.BlockSpec((TB, TS, TH), lambda b, hh, s: (b, s, hh)),
                pl.BlockSpec((TB, TS), lambda b, hh, s: (b, s)),
            ],
            out_specs=pl.BlockSpec((TB, TH), lambda b, hh, s: (b, hh)),
            scratch_shapes=[pltpu.VMEM((TB, 1), jnp.float32)],
        ),
        compiler_params=pltpu.CompilerParams(
            dimension_semantics=("parallel", "parallel", "arbitrary"),
            vmem_limit_bytes=vmem_limit_bytes,
        ),
    )(last_hidden_state, m)

    return out


def _reference_mean_pooling(last_hidden_state, attention_mask):
    mask_exp = attention_mask[..., None].astype(jnp.float32)
    sum_emb = jnp.sum(last_hidden_state.astype(jnp.float32) * mask_exp, axis=1)
    sum_mask = jnp.clip(jnp.sum(mask_exp, axis=1), 1e-9, None)
    return sum_emb / sum_mask


if __name__ == "__main__":
    key = jax.random.PRNGKey(0)
    k1, k2, k3, k4 = jax.random.split(key, 4)

    # --- Small canonical test (matches the module's expected shapes) ---
    B, S, H = 2, 8, 32
    last_hidden_state = jax.random.normal(k1, (B, S, H), dtype=jnp.float32)
    attention_mask = (jax.random.uniform(k2, (B, S)) > 0.3).astype(jnp.int32)
    attention_mask = attention_mask.at[:, -1].set(0)

    out = jax.block_until_ready(mean_pooling(last_hidden_state, attention_mask))
    ref = _reference_mean_pooling(last_hidden_state, attention_mask)
    assert out.shape == (B, H)
    assert jnp.allclose(out, ref, atol=1e-5, rtol=1e-5), "mismatch vs reference (small)"

    # --- Ragged test: S tail (200 % 128 != 0) and batch tail (10 % 8 != 0)
    #     handled in-kernel, with NO wrapper-side padding of the hidden states.
    B2, S2, H2 = 10, 200, 256
    h2 = jax.random.normal(k3, (B2, S2, H2), dtype=jnp.float32)
    m2 = (jax.random.uniform(k4, (B2, S2)) > 0.4).astype(jnp.int32)
    m2 = m2.at[:, -5:].set(0)

    out2 = jax.block_until_ready(mean_pooling(h2, m2, block_s=128))  # forces 2 S-tiles
    ref2 = _reference_mean_pooling(h2, m2)
    assert out2.shape == (B2, H2)
    assert jnp.allclose(out2, ref2, atol=1e-5, rtol=1e-4), "mismatch vs reference (tiled)"

    # --- Default tiling path (single full-S tile, batch tail only) ---
    out3 = jax.block_until_ready(mean_pooling(h2, m2))
    assert jnp.allclose(out3, ref2, atol=1e-5, rtol=1e-4), "mismatch vs reference (default)"

    print("KERNEL_OK")
</pallas_src>

<mosaic_0001>
module attributes {stable_mosaic.version = 11 : i64} {
  func.func @_mean_pool_kernel(%arg0: i32, %arg1: i32, %arg2: i32, %arg3: memref<2x8x32xf32, #tpu.memory_space<vmem>>, %arg4: memref<2x8xi32, #tpu.memory_space<vmem>>, %arg5: memref<2x32xf32, #tpu.memory_space<vmem>>, %arg6: memref<2x1xf32, #tpu.memory_space<vmem>>) attributes {dimension_semantics = [#tpu.dimension_semantics<parallel>, #tpu.dimension_semantics<parallel>, #tpu.dimension_semantics<arbitrary>], iteration_bounds = array<i64: 1, 1, 1>, scalar_prefetch = 0 : i64, scratch_operands = 1 : i64, tpu.core_type = #tpu.core_type<tc>, window_params = [{transform_indices = @transform_0, window_bounds = array<i64: 2, 8, 32>}, {transform_indices = @transform_1, window_bounds = array<i64: 2, 8>}, {transform_indices = @transform_2, window_bounds = array<i64: 2, 32>}]} {
    %c0_i32 = arith.constant 0 : i32
    %0 = arith.cmpi eq, %arg2, %c0_i32 : i32
    %1 = arith.extui %0 : i1 to i32
    %c0_i32_0 = arith.constant 0 : i32
    %2 = arith.cmpi ne, %1, %c0_i32_0 : i32
    scf.if %2 {
      %cst_16 = arith.constant 0.000000e+00 : f32
      %21 = vector.broadcast %cst_16 : f32 to vector<2x32xf32>
      %c0_17 = arith.constant 0 : index
      %c0_18 = arith.constant 0 : index
      %22 = vector.load %arg5[%c0_17, %c0_18] : memref<2x32xf32, #tpu.memory_space<vmem>>, vector<2x32xf32>
      tpu.vector_store %arg5[%c0_17, %c0_18], %21 {strides = array<i32>} : memref<2x32xf32, #tpu.memory_space<vmem>>, vector<2x32xf32>,
      %cst_19 = arith.constant 0.000000e+00 : f32
      %23 = vector.broadcast %cst_19 : f32 to vector<2x1xf32>
      %c0_20 = arith.constant 0 : index
      %c0_21 = arith.constant 0 : index
      %24 = vector.load %arg6[%c0_20, %c0_21] : memref<2x1xf32, #tpu.memory_space<vmem>>, vector<2x1xf32>
      tpu.vector_store %arg6[%c0_20, %c0_21], %23 {strides = array<i32>} : memref<2x1xf32, #tpu.memory_space<vmem>>, vector<2x1xf32>,
    } else {
    }
    %c0 = arith.constant 0 : index
    %c0_1 = arith.constant 0 : index
    %c0_2 = arith.constant 0 : index
    %3 = vector.load %arg3[%c0, %c0_1, %c0_2] : memref<2x8x32xf32, #tpu.memory_space<vmem>>, vector<2x8x32xf32>
    %c0_3 = arith.constant 0 : index
    %c0_4 = arith.constant 0 : index
    %4 = vector.load %arg4[%c0_3, %c0_4] : memref<2x8xi32, #tpu.memory_space<vmem>>, vector<2x8xi32>
    %5 = arith.sitofp %4 : vector<2x8xi32> to vector<2x8xf32>
    %6 = vector.shape_cast %5 : vector<2x8xf32> to vector<2x8x1xf32>
    %7 = vector.broadcast %6 : vector<2x8x1xf32> to vector<2x8x32xf32>
    %8 = arith.mulf %3, %7 : vector<2x8x32xf32>
    %c0_5 = arith.constant 0 : index
    %c0_6 = arith.constant 0 : index
    %9 = vector.load %arg5[%c0_5, %c0_6] : memref<2x32xf32, #tpu.memory_space<vmem>>, vector<2x32xf32>
    %cst = arith.constant dense<0.000000e+00> : vector<2x32xf32>
    %10 = vector.multi_reduction <add>, %8, %cst [1] : vector<2x8x32xf32> to vector<2x32xf32>
    %11 = arith.addf %9, %10 : vector<2x32xf32>
    %c0_7 = arith.constant 0 : index
    %c0_8 = arith.constant 0 : index
    %12 = vector.load %arg5[%c0_7, %c0_8] : memref<2x32xf32, #tpu.memory_space<vmem>>, vector<2x32xf32>
    tpu.vector_store %arg5[%c0_7, %c0_8], %11 {strides = array<i32>} : memref<2x32xf32, #tpu.memory_space<vmem>>, vector<2x32xf32>,
    %c0_9 = arith.constant 0 : index
    %c0_10 = arith.constant 0 : index
    %13 = vector.load %arg6[%c0_9, %c0_10] : memref<2x1xf32, #tpu.memory_space<vmem>>, vector<2x1xf32>
    %cst_11 = arith.constant dense<0.000000e+00> : vector<2xf32>
    %14 = vector.multi_reduction <add>, %5, %cst_11 [1] : vector<2x8xf32> to vector<2xf32>
    %15 = vector.shape_cast %14 : vector<2xf32> to vector<2x1xf32>
    %16 = arith.addf %13, %15 : vector<2x1xf32>
    %c0_12 = arith.constant 0 : index
    %c0_13 = arith.constant 0 : index
    %17 = vector.load %arg6[%c0_12, %c0_13] : memref<2x1xf32, #tpu.memory_space<vmem>>, vector<2x1xf32>
    tpu.vector_store %arg6[%c0_12, %c0_13], %16 {strides = array<i32>} : memref<2x1xf32, #tpu.memory_space<vmem>>, vector<2x1xf32>,
    %c0_i32_14 = arith.constant 0 : i32
    %18 = arith.cmpi eq, %arg2, %c0_i32_14 : i32
    %19 = arith.extui %18 : i1 to i32
    %c0_i32_15 = arith.constant 0 : i32
    %20 = arith.cmpi ne, %19, %c0_i32_15 : i32
    scf.if %20 {
      %c0_16 = arith.constant 0 : index
      %c0_17 = arith.constant 0 : index
      %21 = vector.load %arg5[%c0_16, %c0_17] : memref<2x32xf32, #tpu.memory_space<vmem>>, vector<2x32xf32>
      %c0_18 = arith.constant 0 : index
      %c0_19 = arith.constant 0 : index
      %22 = vector.load %arg6[%c0_18, %c0_19] : memref<2x1xf32, #tpu.memory_space<vmem>>, vector<2x1xf32>
      %cst_20 = arith.constant 9.99999971E-10 : f32
      %23 = vector.broadcast %cst_20 : f32 to vector<2x1xf32>
      %24 = arith.maximumf %22, %23 : vector<2x1xf32>
      %cst_21 = arith.constant 1.000000e+00 : f32
      %25 = vector.broadcast %cst_21 : f32 to vector<2x1xf32>
      %26 = arith.divf %25, %24 : vector<2x1xf32>
      %27 = vector.broadcast %26 : vector<2x1xf32> to vector<2x32xf32>
      %28 = arith.mulf %21, %27 : vector<2x32xf32>
      %c0_22 = arith.constant 0 : index
      %c0_23 = arith.constant 0 : index
      %29 = vector.load %arg5[%c0_22, %c0_23] : memref<2x32xf32, #tpu.memory_space<vmem>>, vector<2x32xf32>
      tpu.vector_store %arg5[%c0_22, %c0_23], %28 {strides = array<i32>} : memref<2x32xf32, #tpu.memory_space<vmem>>, vector<2x32xf32>,
    } else {
    }
    return
  }
  func.func @transform_0(%arg0: i32, %arg1: i32, %arg2: i32) -> (i32, i32, i32) {
    %c0_i32 = arith.constant 0 : i32
    return %arg0, %arg2, %arg1 : i32, i32, i32
  }
  func.func @transform_1(%arg0: i32, %arg1: i32, %arg2: i32) -> (i32, i32) {
    %c0_i32 = arith.constant 0 : i32
    return %arg0, %arg2 : i32, i32
  }
  func.func @transform_2(%arg0: i32, %arg1: i32, %arg2: i32) -> (i32, i32) {
    %c0_i32 = arith.constant 0 : i32
    return %arg0, %arg1 : i32, i32
  }
}

</mosaic_0001>

<llo_original>
// kernel: tpu_custom_call.1
$region0: #{tpu_custom_call.1}
  #allocation0 [shape = 'u32[]', space=smem, size = 0x4, offset = 0x4, fixed_abs, tag = 'smem constant byte address 0x4 - core index']
  #allocation1 [shape = 'u32[144,128]{1,0:T(1,128)}', space=vmem, size = 0x12000, scoped, tag = 'internal scratch']
  #allocation2 [shape = 'f32[2,1]{1,0:T(2,128)}', space=vmem, size = 0x400, scoped, tag = 'scratch operand']
  %s0 = inlined_call_operand.hbm [shape: f32[2,8,32], index: 0, kind: input, shape index: {}]
  %s1 = inlined_call_operand.vmem [shape: s32[2,8], index: 1, kind: input, shape index: {}]
  %s2 = inlined_call_operand.hbm [shape: f32[2,32], index: 2, kind: output, shape index: {}]
  %s3 = sld [smem:[#allocation0]]
  $region30: #{tpu_custom_call.1} parent=0
    _
  %s5 = ssub.s32 1, %s3
  %s6 = scalar_select 0, %s5, %s3
  $region1: #{tpu_custom_call.1} parent=0
    #allocation3 [shape = 'u8[8192]{0}', space=vmem, size = 0x2000, scoped, tag = 'input window, operand 0, single buffered']
    #allocation4 [shape = 's32[1]{0}', space=sflag, size = 0x4, scoped, tag = 'scoped memory for tpu_custom_call.1']
    #allocation5 [shape = 's32[1]{0}', space=sflag, size = 0x4, scoped, tag = 'scoped memory for tpu_custom_call.1']
    #allocation6 [shape = 'u8[1024]{0}', space=vmem, size = 0x400, scoped, tag = 'output window, operand 0, single buffered']
    %7 = vsyncpa [#allocation4], 0
    %8 = vsyncpa [#allocation5], 0
    // Predicated region
    $region2: #{tpu_custom_call.1} parent=1 // pred_check
      _
    $region3: #{tpu_custom_call.1} parent=1 // pred_check_branch
      %10 = sbr.rel (0) target = $region5
    $region4: #{tpu_custom_call.1} parent=1 // pred_region
      %s12 = ssub.s32 256, 256
      %13 = vsyncadd [#allocation4], %s12
      %s14 = sshll.u32 [#allocation3], 4
      %s15 = int_to_ptr.vmem [resolvable:$true] %s14
      %20 = dma.hbm_to_vmem [thread:$0]  %s0, 256, %s15, [#allocation4], 128, 128, 8
    $region5: #{tpu_custom_call.1} parent=1 // pred_fallthru
      _
    // Predicated region
    $region6: #{tpu_custom_call.1} parent=1 // pred_check
      _
    $region7: #{tpu_custom_call.1} parent=1 // pred_check_branch
      %22 = sbr.rel (0) target = $region9
    $region8: #{tpu_custom_call.1} parent=1 // pred_region
      _
    $region9: #{tpu_custom_call.1} parent=1 // pred_fallthru
      _
    // Predicated region
    $region10: #{tpu_custom_call.1} parent=1 // pred_check
      _
    $region11: #{tpu_custom_call.1} parent=1 // pred_check_branch
      %24 = sbr.rel (0) target = $region13
    $region12: #{tpu_custom_call.1} parent=1 // pred_region
      %25 = dma.done [#allocation4], 256
    $region13: #{tpu_custom_call.1} parent=1 // pred_fallthru
      _
    %p26 = scmp.eq.s32.totalorder 0, 0
    // Predicated region
    $region14: #{tpu_custom_call.1} parent=1 // pred_check
      %p27 = pneg %p26
    $region15: #{tpu_custom_call.1} parent=1 // pred_check_branch
      %29 = sbr.rel (%p27) target = $region17
    $region16: #{tpu_custom_call.1} parent=1 // pred_region
      %vm30 = vcmask 254976
      %31 = vst.msk [vmem:[#allocation6] sm:$0x3] %vm30, 0.0
      %vm32 = vcmask 1024
      %33 = vst.msk [vmem:[#allocation2] sm:$0x3] %vm32, 0.0
    $region17: #{tpu_custom_call.1} parent=1 // pred_fallthru
      _
    %v34 = vld [vmem:[#allocation3] sm:$0xff]
    %v35 = vld [vmem:[#allocation3 + $0x8] sm:$0xff]
    %v36 = vld [vmem:[%s1] sm:$0x3]
    %v37 = vcvt.s32.f32 %v36
    %v38 = vlaneseq
    %v39 = vshrl.u32 %v38, 7
    %v40 = vsub.s32 0, %v39
    %v41 = vrot.slane %v37, %v40
    %43 = vbcast.lane.b32.xlu0 %v41, 256
    %v44 = vpop.permute.xlu0 %43
    %v45 = vlaneseq
    %v46 = vshrl.u32 %v45, 7
    %v47 = vsub.s32 1, %v46
    %v48 = vrot.slane %v37, %v47
    %50 = vbcast.lane.b32.xlu0 %v48, 256
    %v51 = vpop.permute.xlu0 %50
    %v52 = vmul.f32 %v34, %v44
    %v53 = vmul.f32 %v35, %v51
    %v54 = vld [vmem:[#allocation6] sm:$0x3]
    %vm55 = vcmask 261120
    %v56 = vsel %vm55, %v52, 0.0
    %v57 = vrot.slane %v56, 4
    %v58 = vadd.f32 %v56, %v57
    %v59 = vrot.slane %v58, 2
    %v60 = vadd.f32 %v58, %v59
    %v61 = vrot.slane %v60, 1
    %v62 = vadd.f32 %v60, %v61
    %v63 = vsel %vm55, %v53, 0.0
    %v64 = vrot.slane %v63, 4
    %v65 = vadd.f32 %v63, %v64
    %v66 = vrot.slane %v65, 2
    %v67 = vadd.f32 %v65, %v66
    %v68 = vrot.slane %v67, 1
    %v69 = vadd.f32 %v67, %v68
    %vm72 = vcmask 1041409
    %v73 = vsel %vm72, %v69, %v62
    %v75 = vadd.f32 %v54, %v73
    %vm76 = vcmask 254976
    %77 = vst.msk [vmem:[#allocation6] sm:$0x3] %vm76, %v75
    %v78 = vld [vmem:[#allocation2] sm:$0x3]
    %vm79 = vcmask 58368
    %v80 = vsel %vm79, %v37, 0.0
    %81 = vadd.xlane.f32.xlu0 %v80
    %v82 = vpop.xlane.xlu0 %81
    %v83 = vadd.f32 %v78, %v82
    %vm84 = vcmask 1024
    %85 = vst.msk [vmem:[#allocation2] sm:$0x3] %vm84, %v83
    // Predicated region
    $region18: #{tpu_custom_call.1} parent=1 // pred_check
      %p86 = pneg %p26
    $region19: #{tpu_custom_call.1} parent=1 // pred_check_branch
      %88 = sbr.rel (%p86) target = $region21
    $region20: #{tpu_custom_call.1} parent=1 // pred_region
      %v89 = vld [vmem:[#allocation6] sm:$0x3]
      %v90 = vld [vmem:[#allocation2] sm:$0x3]
      %v91 = vmax.f32 %v90, 1e-09
      %v92 = vrcp.pop %v91
      %v93 = vmul.f32 1.0, %v92
      %95 = vset.pattern.permute.xlu0 0
      %96 = vperm.xlu0 %95, %v93
      %v97 = vpop.permute.xlu0 %96
      %v99 = vmul.f32 %v89, %v97
      %100 = vst.msk [vmem:[#allocation6] sm:$0x3] %vm76, %v99
    $region21: #{tpu_custom_call.1} parent=1 // pred_fallthru
      _
    // Predicated region
    $region22: #{tpu_custom_call.1} parent=1 // pred_check
      _
    $region23: #{tpu_custom_call.1} parent=1 // pred_check_branch
      %102 = sbr.rel (0) target = $region25
    $region24: #{tpu_custom_call.1} parent=1 // pred_region
      %s104 = ssub.s32 32, 32
      %105 = vsyncadd [#allocation5], %s104
      %s107 = sshll.u32 [#allocation6], 4
      %s108 = int_to_ptr.vmem [resolvable:$true] %s107
      %110 = dma.vmem_to_hbm [thread:$0]  %s108, 32, %s2, [#allocation5]
    $region25: #{tpu_custom_call.1} parent=1 // pred_fallthru
      _
    // Predicated region
    $region26: #{tpu_custom_call.1} parent=1 // pred_check
      _
    $region27: #{tpu_custom_call.1} parent=1 // pred_check_branch
      %112 = sbr.rel (0) target = $region29
    $region28: #{tpu_custom_call.1} parent=1 // pred_region
      %113 = dma.done [#allocation5], 32
    $region29: #{tpu_custom_call.1} parent=1 // pred_fallthru
      _
    %114 = vsyncpa [#allocation4], 1
    %115 = vsyncpa [#allocation5], 1

</llo_original>
